<compile_context>
chip_gen: v7x
topology: tpu7x:2x2x1
jax: 0.10.0
libtpu: 0.0.40
codegen_flags: <defaults>
</compile_context>

<pallas_src>
import jax
import jax.numpy as jnp
from jax import lax
from jax.experimental import pallas as pl
from jax.experimental.pallas import tpu as pltpu

BN_EPS = 1e-5
_LANE = 128


def _round_up(x, m):
    return (x + m - 1) // m * m


def _pick_tile(dim, candidates):
    for c in candidates:
        if dim % c == 0:
            return c
    return dim


def linear_cell_kernel(x_ref, w_ref, b_ref, g_ref, beta_ref, o_ref, acc_ref):
    k = pl.program_id(1)

    @pl.when(k == 0)
    def _init():
        acc_ref[...] = jnp.zeros_like(acc_ref)

    # x tile [N, Kt] contracted with weight tile [Ft, Kt] along K -> [N, Ft] (f32 MXU accumulate).
    acc_ref[...] += lax.dot_general(
        x_ref[...], w_ref[...],
        dimension_numbers=(((1,), (1,)), ((), ())),
        preferred_element_type=jnp.float32)

    @pl.when(k == pl.num_programs(1) - 1)
    def _finalize():
        y = acc_ref[...] + b_ref[...]                          # [N, Ft] + [1, Ft]
        # BatchNorm1d, training mode: full-batch mean + biased variance (two-pass, centered form).
        mean = jnp.mean(y, axis=0, keepdims=True)              # [1, Ft]
        centered = y - mean
        var = jnp.mean(centered * centered, axis=0, keepdims=True)
        inv_std = lax.rsqrt(var + BN_EPS)                      # EUP slot
        y_bn = centered * inv_std * g_ref[...] + beta_ref[...]
        o_ref[...] = jnp.maximum(y_bn, 0.0).astype(o_ref.dtype)


def linear_cell(x, weight, bias, gamma, beta, *, compute_dtype=None, out_dtype=jnp.float32):
    """x: [N, F_in]; weight: [F_out, F_in] (PyTorch layout); bias/gamma/beta: [F_out]."""
    n, f_in = x.shape
    f_out = weight.shape[0]

    cdt = compute_dtype if compute_dtype is not None else jnp.promote_types(x.dtype, weight.dtype)

    # Pad K and F_out up to lane multiples (zero padding does not change the Linear output for the
    # real features; padded output features are sliced off at the end).
    k_pad = _round_up(f_in, _LANE)
    fout_pad = _round_up(f_out, _LANE)

    x_p = jnp.pad(x.astype(cdt), ((0, 0), (0, k_pad - f_in)))
    w_p = jnp.pad(weight.astype(cdt), ((0, fout_pad - f_out), (0, k_pad - f_in)))
    b_p = jnp.pad(bias.astype(jnp.float32), (0, fout_pad - f_out)).reshape(1, fout_pad)
    g_p = jnp.pad(gamma.astype(jnp.float32), (0, fout_pad - f_out)).reshape(1, fout_pad)
    be_p = jnp.pad(beta.astype(jnp.float32), (0, fout_pad - f_out)).reshape(1, fout_pad)

    # Lane-dense tiles. F_out tiles feed the MXU output dimension; K tiles drive the reduction.
    fout_tile = _pick_tile(fout_pad, (512, 256, 128))
    k_tile = _pick_tile(k_pad, (512, 256, 128))
    grid = (fout_pad // fout_tile, k_pad // k_tile)

    # VMEM budget: double-buffered x/W input tiles + param rows + accumulator + output tile.
    in_bytes = jnp.dtype(cdt).itemsize
    est = (2 * (n * k_tile + fout_tile * k_tile) * in_bytes
           + 2 * 3 * fout_tile * 4
           + n * fout_tile * 4
           + 2 * n * fout_tile * 4)
    vmem_limit = int(min(max(2 * est, 4 << 20), 64 << 20))

    grid_spec = pltpu.PrefetchScalarGridSpec(
        num_scalar_prefetch=0,
        grid=grid,
        in_specs=[
            pl.BlockSpec((n, k_tile), lambda j, k: (0, k)),          # x
            pl.BlockSpec((fout_tile, k_tile), lambda j, k: (j, k)),  # weight [F_out, F_in]
            pl.BlockSpec((1, fout_tile), lambda j, k: (0, j)),       # bias
            pl.BlockSpec((1, fout_tile), lambda j, k: (0, j)),       # gamma
            pl.BlockSpec((1, fout_tile), lambda j, k: (0, j)),       # beta
        ],
        out_specs=pl.BlockSpec((n, fout_tile), lambda j, k: (0, j)),
        scratch_shapes=[pltpu.VMEM((n, fout_tile), jnp.float32)],
    )

    out_p = pl.pallas_call(
        linear_cell_kernel,
        out_shape=jax.ShapeDtypeStruct((n, fout_pad), out_dtype),
        grid_spec=grid_spec,
        compiler_params=pltpu.CompilerParams(
            dimension_semantics=("parallel", "arbitrary"),
            vmem_limit_bytes=vmem_limit,
        ),
    )(x_p, w_p, b_p, g_p, be_p)

    return out_p[:, :f_out]


def linear_cell_ref(x, weight, bias, gamma, beta):
    y = x @ weight.T + bias
    mean = jnp.mean(y, axis=0, keepdims=True)
    var = jnp.mean((y - mean) ** 2, axis=0, keepdims=True)
    y = (y - mean) / jnp.sqrt(var + BN_EPS)
    y = y * gamma + beta
    return jnp.maximum(y, 0.0)


if __name__ == "__main__":
    key = jax.random.PRNGKey(0)
    k_x, k_w, k_b = jax.random.split(key, 3)

    N, F_IN, F_OUT = 8, 32, 16

    x = jax.random.normal(k_x, (N, F_IN), dtype=jnp.float32)

    # Deterministic parameter init (nn.Linear-like uniform fan-in scaling).
    bound = 1.0 / (F_IN ** 0.5)
    weight = jax.random.uniform(k_w, (F_OUT, F_IN), minval=-bound, maxval=bound,
                                dtype=jnp.float32)
    bias = jax.random.uniform(k_b, (F_OUT,), minval=-bound, maxval=bound,
                              dtype=jnp.float32)
    gamma = jnp.ones((F_OUT,), dtype=jnp.float32)   # BatchNorm1d default affine init
    beta = jnp.zeros((F_OUT,), dtype=jnp.float32)

    ref = linear_cell_ref(x, weight, bias, gamma, beta)

    # f32 path (caller dtype preserved, no wrapper upcasts/transposes).
    out = linear_cell(x, weight, bias, gamma, beta)
    out = jax.block_until_ready(out)
    assert out.shape == (N, F_OUT)
    assert jnp.allclose(out, ref, atol=1e-4, rtol=1e-4)

    # bf16 fast path (native MXU input dtype; f32 accumulation + f32 BN epilogue).
    out_bf16 = linear_cell(x, weight, bias, gamma, beta, compute_dtype=jnp.bfloat16)
    out_bf16 = jax.block_until_ready(out_bf16)
    assert jnp.allclose(out_bf16, ref, atol=8e-2, rtol=8e-2)

    print("KERNEL_OK")
</pallas_src>

<mosaic_0001>
module attributes {stable_mosaic.version = 11 : i64} {
  func.func @linear_cell_kernel(%arg0: i32, %arg1: i32, %arg2: memref<8x128xf32, #tpu.memory_space<vmem>>, %arg3: memref<128x128xf32, #tpu.memory_space<vmem>>, %arg4: memref<1x128xf32, #tpu.memory_space<vmem>>, %arg5: memref<1x128xf32, #tpu.memory_space<vmem>>, %arg6: memref<1x128xf32, #tpu.memory_space<vmem>>, %arg7: memref<8x128xf32, #tpu.memory_space<vmem>>, %arg8: memref<8x128xf32, #tpu.memory_space<vmem>>) attributes {dimension_semantics = [#tpu.dimension_semantics<parallel>, #tpu.dimension_semantics<arbitrary>], iteration_bounds = array<i64: 1, 1>, scalar_prefetch = 0 : i64, scratch_operands = 1 : i64, tpu.core_type = #tpu.core_type<tc>, window_params = [{transform_indices = @transform_0, window_bounds = array<i64: 8, 128>}, {transform_indices = @transform_1, window_bounds = array<i64: 128, 128>}, {transform_indices = @transform_2, window_bounds = array<i64: 1, 128>}, {transform_indices = @transform_3, window_bounds = array<i64: 1, 128>}, {transform_indices = @transform_4, window_bounds = array<i64: 1, 128>}, {transform_indices = @transform_5, window_bounds = array<i64: 8, 128>}]} {
    %c0_i32 = arith.constant 0 : i32
    %0 = arith.cmpi eq, %arg1, %c0_i32 : i32
    %1 = arith.extui %0 : i1 to i32
    %c0_i32_0 = arith.constant 0 : i32
    %2 = arith.cmpi ne, %1, %c0_i32_0 : i32
    scf.if %2 {
      %cst_10 = arith.constant 0.000000e+00 : f32
      %12 = vector.broadcast %cst_10 : f32 to vector<8x128xf32>
      %c0_11 = arith.constant 0 : index
      %c0_12 = arith.constant 0 : index
      %13 = vector.load %arg8[%c0_11, %c0_12] : memref<8x128xf32, #tpu.memory_space<vmem>>, vector<8x128xf32>
      tpu.vector_store %arg8[%c0_11, %c0_12], %12 {strides = array<i32>} : memref<8x128xf32, #tpu.memory_space<vmem>>, vector<8x128xf32>,
    } else {
    }
    %c0 = arith.constant 0 : index
    %c0_1 = arith.constant 0 : index
    %3 = vector.load %arg8[%c0, %c0_1] : memref<8x128xf32, #tpu.memory_space<vmem>>, vector<8x128xf32>
    %c0_2 = arith.constant 0 : index
    %c0_3 = arith.constant 0 : index
    %4 = vector.load %arg2[%c0_2, %c0_3] : memref<8x128xf32, #tpu.memory_space<vmem>>, vector<8x128xf32>
    %c0_4 = arith.constant 0 : index
    %c0_5 = arith.constant 0 : index
    %5 = vector.load %arg3[%c0_4, %c0_5] : memref<128x128xf32, #tpu.memory_space<vmem>>, vector<128x128xf32>
    %cst = arith.constant dense<0.000000e+00> : vector<8x128xf32>
    %6 = tpu.matmul %4, %5, %cst {dimension_numbers = #tpu.dot_dimension_numbers<[1], [1], [0], [0], [0, 0, 1, 0], [], []>} : vector<8x128xf32>, vector<128x128xf32>, vector<8x128xf32> -> vector<8x128xf32>
    %7 = arith.addf %3, %6 : vector<8x128xf32>
    %c0_6 = arith.constant 0 : index
    %c0_7 = arith.constant 0 : index
    %8 = vector.load %arg8[%c0_6, %c0_7] : memref<8x128xf32, #tpu.memory_space<vmem>>, vector<8x128xf32>
    tpu.vector_store %arg8[%c0_6, %c0_7], %7 {strides = array<i32>} : memref<8x128xf32, #tpu.memory_space<vmem>>, vector<8x128xf32>,
    %c0_i32_8 = arith.constant 0 : i32
    %9 = arith.cmpi eq, %arg1, %c0_i32_8 : i32
    %10 = arith.extui %9 : i1 to i32
    %c0_i32_9 = arith.constant 0 : i32
    %11 = arith.cmpi ne, %10, %c0_i32_9 : i32
    scf.if %11 {
      %c0_10 = arith.constant 0 : index
      %c0_11 = arith.constant 0 : index
      %12 = vector.load %arg8[%c0_10, %c0_11] : memref<8x128xf32, #tpu.memory_space<vmem>>, vector<8x128xf32>
      %c0_12 = arith.constant 0 : index
      %c0_13 = arith.constant 0 : index
      %13 = vector.load %arg4[%c0_12, %c0_13] : memref<1x128xf32, #tpu.memory_space<vmem>>, vector<1x128xf32>
      %14 = vector.broadcast %13 : vector<1x128xf32> to vector<8x128xf32>
      %15 = arith.addf %12, %14 : vector<8x128xf32>
      %cst_14 = arith.constant dense<0.000000e+00> : vector<128xf32>
      %16 = vector.multi_reduction <add>, %15, %cst_14 [0] : vector<8x128xf32> to vector<128xf32>
      %17 = vector.shape_cast %16 : vector<128xf32> to vector<1x128xf32>
      %cst_15 = arith.constant 8.000000e+00 : f32
      %18 = vector.broadcast %cst_15 : f32 to vector<1x128xf32>
      %19 = arith.divf %17, %18 : vector<1x128xf32>
      %20 = vector.broadcast %19 : vector<1x128xf32> to vector<8x128xf32>
      %21 = arith.subf %15, %20 : vector<8x128xf32>
      %22 = arith.mulf %21, %21 : vector<8x128xf32>
      %cst_16 = arith.constant dense<0.000000e+00> : vector<128xf32>
      %23 = vector.multi_reduction <add>, %22, %cst_16 [0] : vector<8x128xf32> to vector<128xf32>
      %24 = vector.shape_cast %23 : vector<128xf32> to vector<1x128xf32>
      %cst_17 = arith.constant 8.000000e+00 : f32
      %25 = vector.broadcast %cst_17 : f32 to vector<1x128xf32>
      %26 = arith.divf %24, %25 : vector<1x128xf32>
      %cst_18 = arith.constant 9.99999974E-6 : f32
      %27 = vector.broadcast %cst_18 : f32 to vector<1x128xf32>
      %28 = arith.addf %26, %27 : vector<1x128xf32>
      %29 = math.rsqrt %28 : vector<1x128xf32>
      %30 = vector.broadcast %29 : vector<1x128xf32> to vector<8x128xf32>
      %31 = arith.mulf %21, %30 : vector<8x128xf32>
      %c0_19 = arith.constant 0 : index
      %c0_20 = arith.constant 0 : index
      %32 = vector.load %arg5[%c0_19, %c0_20] : memref<1x128xf32, #tpu.memory_space<vmem>>, vector<1x128xf32>
      %33 = vector.broadcast %32 : vector<1x128xf32> to vector<8x128xf32>
      %34 = arith.mulf %31, %33 : vector<8x128xf32>
      %c0_21 = arith.constant 0 : index
      %c0_22 = arith.constant 0 : index
      %35 = vector.load %arg6[%c0_21, %c0_22] : memref<1x128xf32, #tpu.memory_space<vmem>>, vector<1x128xf32>
      %36 = vector.broadcast %35 : vector<1x128xf32> to vector<8x128xf32>
      %37 = arith.addf %34, %36 : vector<8x128xf32>
      %cst_23 = arith.constant 0.000000e+00 : f32
      %38 = vector.broadcast %cst_23 : f32 to vector<8x128xf32>
      %39 = arith.maximumf %37, %38 : vector<8x128xf32>
      %c0_24 = arith.constant 0 : index
      %c0_25 = arith.constant 0 : index
      %40 = vector.load %arg7[%c0_24, %c0_25] : memref<8x128xf32, #tpu.memory_space<vmem>>, vector<8x128xf32>
      tpu.vector_store %arg7[%c0_24, %c0_25], %39 {strides = array<i32>} : memref<8x128xf32, #tpu.memory_space<vmem>>, vector<8x128xf32>,
    } else {
    }
    return
  }
  func.func @transform_0(%arg0: i32, %arg1: i32) -> (i32, i32) {
    %c0_i32 = arith.constant 0 : i32
    %c0_i32_0 = arith.constant 0 : i32
    return %c0_i32, %arg1 : i32, i32
  }
  func.func @transform_1(%arg0: i32, %arg1: i32) -> (i32, i32) {
    %c0_i32 = arith.constant 0 : i32
    return %arg0, %arg1 : i32, i32
  }
  func.func @transform_2(%arg0: i32, %arg1: i32) -> (i32, i32) {
    %c0_i32 = arith.constant 0 : i32
    %c0_i32_0 = arith.constant 0 : i32
    return %c0_i32, %arg0 : i32, i32
  }
  func.func @transform_3(%arg0: i32, %arg1: i32) -> (i32, i32) {
    %c0_i32 = arith.constant 0 : i32
    %c0_i32_0 = arith.constant 0 : i32
    return %c0_i32, %arg0 : i32, i32
  }
  func.func @transform_4(%arg0: i32, %arg1: i32) -> (i32, i32) {
    %c0_i32 = arith.constant 0 : i32
    %c0_i32_0 = arith.constant 0 : i32
    return %c0_i32, %arg0 : i32, i32
  }
  func.func @transform_5(%arg0: i32, %arg1: i32) -> (i32, i32) {
    %c0_i32 = arith.constant 0 : i32
    %c0_i32_0 = arith.constant 0 : i32
    return %c0_i32, %arg0 : i32, i32
  }
}

</mosaic_0001>

<llo_original>
// kernel: tpu_custom_call.1
$region0: #{tpu_custom_call.1}
  #allocation0 [shape = 'u32[]', space=smem, size = 0x4, offset = 0x4, fixed_abs, tag = 'smem constant byte address 0x4 - core index']
  #allocation1 [shape = 'u32[144,128]{1,0:T(1,128)}', space=vmem, size = 0x12000, scoped, tag = 'internal scratch']
  #allocation2 [shape = 'f32[8,128]{1,0:T(8,128)}', space=vmem, size = 0x1000, scoped, tag = 'scratch operand']
  %s0 = inlined_call_operand.hbm [shape: f32[8,128], index: 0, kind: input, shape index: {}]
  %s1 = inlined_call_operand.hbm [shape: f32[128,128], index: 1, kind: input, shape index: {}]
  %s2 = inlined_call_operand.vmem [shape: f32[1,128], index: 2, kind: input, shape index: {}]
  %s3 = inlined_call_operand.vmem [shape: f32[1,128], index: 3, kind: input, shape index: {}]
  %s4 = inlined_call_operand.vmem [shape: f32[1,128], index: 4, kind: input, shape index: {}]
  %s5 = inlined_call_operand.hbm [shape: f32[8,128], index: 5, kind: output, shape index: {}]
  %s6 = sld [smem:[#allocation0]]
  $region46: #{tpu_custom_call.1} parent=0
    _
  %s8 = ssub.s32 1, %s6
  %s9 = scalar_select 0, %s8, %s6
  $region1: #{tpu_custom_call.1} parent=0
    #allocation3 [shape = 'u8[4096]{0}', space=vmem, size = 0x1000, scoped, tag = 'input window, operand 0, single buffered']
    #allocation4 [shape = 's32[1]{0}', space=sflag, size = 0x4, scoped, tag = 'scoped memory for tpu_custom_call.1']
    #allocation5 [shape = 's32[1]{0}', space=sflag, size = 0x4, scoped, tag = 'scoped memory for tpu_custom_call.1']
    #allocation6 [shape = 'u8[65536]{0}', space=vmem, size = 0x10000, scoped, tag = 'input window, operand 1, single buffered']
    #allocation7 [shape = 's32[1]{0}', space=sflag, size = 0x4, scoped, tag = 'scoped memory for tpu_custom_call.1']
    #allocation8 [shape = 'u8[4096]{0}', space=vmem, size = 0x1000, scoped, tag = 'output window, operand 0, single buffered']
    %10 = vsyncpa [#allocation4], 0
    %11 = vsyncpa [#allocation7], 0
    %12 = vsyncpa [#allocation5], 0
    // Predicated region
    $region2: #{tpu_custom_call.1} parent=1 // pred_check
      _
    $region3: #{tpu_custom_call.1} parent=1 // pred_check_branch
      %14 = sbr.rel (0) target = $region5
    $region4: #{tpu_custom_call.1} parent=1 // pred_region
      %s16 = ssub.s32 128, 128
      %17 = vsyncadd [#allocation4], %s16
      %s19 = sshll.u32 [#allocation3], 4
      %s20 = int_to_ptr.vmem [resolvable:$true] %s19
      %22 = dma.hbm_to_vmem [thread:$0]  %s0, 128, %s20, [#allocation4]
    $region5: #{tpu_custom_call.1} parent=1 // pred_fallthru
      _
    // Predicated region
    $region6: #{tpu_custom_call.1} parent=1 // pred_check
      _
    $region7: #{tpu_custom_call.1} parent=1 // pred_check_branch
      %24 = sbr.rel (0) target = $region9
    $region8: #{tpu_custom_call.1} parent=1 // pred_region
      %s26 = ssub.s32 2048, 2048
      %27 = vsyncadd [#allocation7], %s26
      %s28 = sshll.u32 [#allocation6], 4
      %s29 = int_to_ptr.vmem [resolvable:$true] %s28
      %34 = dma.hbm_to_vmem [thread:$0]  %s1, 2048, %s29, [#allocation7], 128, 128, 8
    $region9: #{tpu_custom_call.1} parent=1 // pred_fallthru
      _
    // Predicated region
    $region10: #{tpu_custom_call.1} parent=1 // pred_check
      _
    $region11: #{tpu_custom_call.1} parent=1 // pred_check_branch
      %36 = sbr.rel (0) target = $region13
    $region12: #{tpu_custom_call.1} parent=1 // pred_region
      _
    $region13: #{tpu_custom_call.1} parent=1 // pred_fallthru
      _
    // Predicated region
    $region14: #{tpu_custom_call.1} parent=1 // pred_check
      _
    $region15: #{tpu_custom_call.1} parent=1 // pred_check_branch
      %38 = sbr.rel (0) target = $region17
    $region16: #{tpu_custom_call.1} parent=1 // pred_region
      _
    $region17: #{tpu_custom_call.1} parent=1 // pred_fallthru
      _
    // Predicated region
    $region18: #{tpu_custom_call.1} parent=1 // pred_check
      _
    $region19: #{tpu_custom_call.1} parent=1 // pred_check_branch
      %40 = sbr.rel (0) target = $region21
    $region20: #{tpu_custom_call.1} parent=1 // pred_region
      _
    $region21: #{tpu_custom_call.1} parent=1 // pred_fallthru
      _
    // Predicated region
    $region22: #{tpu_custom_call.1} parent=1 // pred_check
      _
    $region23: #{tpu_custom_call.1} parent=1 // pred_check_branch
      %42 = sbr.rel (0) target = $region25
    $region24: #{tpu_custom_call.1} parent=1 // pred_region
      %43 = dma.done [#allocation4], 128
    $region25: #{tpu_custom_call.1} parent=1 // pred_fallthru
      _
    // Predicated region
    $region26: #{tpu_custom_call.1} parent=1 // pred_check
      _
    $region27: #{tpu_custom_call.1} parent=1 // pred_check_branch
      %45 = sbr.rel (0) target = $region29
    $region28: #{tpu_custom_call.1} parent=1 // pred_region
      %46 = dma.done [#allocation7], 2048
    $region29: #{tpu_custom_call.1} parent=1 // pred_fallthru
      _
    %p47 = scmp.eq.s32.totalorder 0, 0
    // Predicated region
    $region30: #{tpu_custom_call.1} parent=1 // pred_check
      %p48 = pneg %p47
    $region31: #{tpu_custom_call.1} parent=1 // pred_check_branch
      %50 = sbr.rel (%p48) target = $region33
    $region32: #{tpu_custom_call.1} parent=1 // pred_region
      %51 = vst [vmem:[#allocation2] sm:$0xff] 0.0
    $region33: #{tpu_custom_call.1} parent=1 // pred_fallthru
      _
    %v52 = vld [vmem:[#allocation2] sm:$0xff]
    %v53 = vld [vmem:[#allocation3] sm:$0xff]
    %v54 = vld [vmem:[#allocation6] sm:$0xff]
    %v55 = vld [vmem:[#allocation6 + $0x8] sm:$0xff]
    %v56 = vld [vmem:[#allocation6 + $0x10] sm:$0xff]
    %v57 = vld [vmem:[#allocation6 + $0x18] sm:$0xff]
    %v58 = vld [vmem:[#allocation6 + $0x20] sm:$0xff]
    %v59 = vld [vmem:[#allocation6 + $0x28] sm:$0xff]
    %v60 = vld [vmem:[#allocation6 + $0x30] sm:$0xff]
    %v61 = vld [vmem:[#allocation6 + $0x38] sm:$0xff]
    %v62 = vld [vmem:[#allocation6 + $0x40] sm:$0xff]
    %v63 = vld [vmem:[#allocation6 + $0x48] sm:$0xff]
    %v64 = vld [vmem:[#allocation6 + $0x50] sm:$0xff]
    %v65 = vld [vmem:[#allocation6 + $0x58] sm:$0xff]
    %v66 = vld [vmem:[#allocation6 + $0x60] sm:$0xff]
    %v67 = vld [vmem:[#allocation6 + $0x68] sm:$0xff]
    %v68 = vld [vmem:[#allocation6 + $0x70] sm:$0xff]
    %v69 = vld [vmem:[#allocation6 + $0x78] sm:$0xff]
    %70 = vmatprep.subr.mxu0 0.0
    %71 = vmatpush1.xpose.msra.mxu0 %v54
    %72 = vmatprep.subr.mxu0 0.0
    %73 = vmatpush1.xpose.msra.mxu0 %v55
    %74 = vmatprep.subr.mxu0 0.0
    %75 = vmatpush1.xpose.msra.mxu0 %v56
    %76 = vmatprep.subr.mxu0 0.0
    %77 = vmatpush1.xpose.msra.mxu0 %v57
    %78 = vmatprep.subr.mxu0 0.0
    %79 = vmatpush1.xpose.msra.mxu0 %v58
    %80 = vmatprep.subr.mxu0 0.0
    %81 = vmatpush1.xpose.msra.mxu0 %v59
    %82 = vmatprep.subr.mxu0 0.0
    %83 = vmatpush1.xpose.msra.mxu0 %v60
    %84 = vmatprep.subr.mxu0 0.0
    %85 = vmatpush1.xpose.msra.mxu0 %v61
    %86 = vmatprep.subr.mxu0 0.0
    %87 = vmatpush1.xpose.msra.mxu0 %v62
    %88 = vmatprep.subr.mxu0 0.0
    %89 = vmatpush1.xpose.msra.mxu0 %v63
    %90 = vmatprep.subr.mxu0 0.0
    %91 = vmatpush1.xpose.msra.mxu0 %v64
    %92 = vmatprep.subr.mxu0 0.0
    %93 = vmatpush1.xpose.msra.mxu0 %v65
    %94 = vmatprep.subr.mxu0 0.0
    %95 = vmatpush1.xpose.msra.mxu0 %v66
    %96 = vmatprep.subr.mxu0 0.0
    %97 = vmatpush1.xpose.msra.mxu0 %v67
    %98 = vmatprep.subr.mxu0 0.0
    %99 = vmatpush1.xpose.msra.mxu0 %v68
    %100 = vmatprep.subr.mxu0 0.0
    %101 = vmatpush1.xpose.msra.mxu0 %v69
    %102 = vmatprep.subr.mxu0 0.0
    %103 = vmatpush1.xpose.msra.mxu0 0.0
    %104 = vmatprep.subr.mxu0 0.0
    %105 = vmatpush1.xpose.msra.mxu0 0.0
    %106 = vmatprep.subr.mxu0 0.0
    %107 = vmatpush1.xpose.msra.mxu0 0.0
    %108 = vmatprep.subr.mxu0 0.0
    %109 = vmatpush1.xpose.msra.mxu0 0.0
    %110 = vmatprep.subr.mxu0 0.0
    %111 = vmatpush1.xpose.msra.mxu0 0.0
    %112 = vmatprep.subr.mxu0 0.0
    %113 = vmatpush1.xpose.msra.mxu0 0.0
    %114 = vmatprep.subr.mxu0 0.0
    %115 = vmatpush1.xpose.msra.mxu0 0.0
    %116 = vmatprep.subr.mxu0 0.0
    %117 = vmatpush1.xpose.msra.mxu0 0.0
    %118 = vmatprep.subr.mxu0 0.0
    %119 = vmatpush1.xpose.msra.mxu0 0.0
    %120 = vmatprep.subr.mxu0 0.0
    %121 = vmatpush1.xpose.msra.mxu0 0.0
    %122 = vmatprep.subr.mxu0 0.0
    %123 = vmatpush1.xpose.msra.mxu0 0.0
    %124 = vmatprep.subr.mxu0 0.0
    %125 = vmatpush1.xpose.msra.mxu0 0.0
    %126 = vmatprep.subr.mxu0 0.0
    %127 = vmatpush1.xpose.msra.mxu0 0.0
    %128 = vmatprep.subr.mxu0 0.0
    %129 = vmatpush1.xpose.msra.mxu0 0.0
    %130 = vmatprep.subr.mxu0 0.0
    %131 = vmatpush1.xpose.msra.mxu0 0.0
    %132 = vmatprep.subr.mxu0 0.0
    %133 = vmatpush1.xpose.msra.mxu0 0.0
    %134 = vmatprep.mubr.f32.mxu0 0.0
    %135 = vmatmul.mubr.f32.gmra.mrb[0].mxu0 %v53
    %v136 = vpop.f32.mrb[0].mxu0
    %v137 = vadd.f32 0.0, %v136
    %v138 = vpop.f32.mrb[0].mxu0
    %139 = vdwg.mxu0
    %v140 = vadd.f32 %v52, %v137
    %141 = vst [vmem:[#allocation2] sm:$0xff] %v140
    // Predicated region
    $region34: #{tpu_custom_call.1} parent=1 // pred_check
      %p142 = pneg %p47
    $region35: #{tpu_custom_call.1} parent=1 // pred_check_branch
      %144 = sbr.rel (%p142) target = $region37
    $region36: #{tpu_custom_call.1} parent=1 // pred_region
      %v145 = vld [vmem:[#allocation2] sm:$0xff]
      %v146 = vld [vmem:[%s2] sm:$0x1]
      %v148 = vlaneseq
      %v149 = vshrl.u32 %v148, 7
      %v150 = vsub.s32 0, %v149
      %v151 = vrot.slane %v146, %v150
      %v153 = vadd.f32 %v145, %v151
      %v154 = vrot.slane %v153, 4
      %v155 = vadd.f32 %v153, %v154
      %v156 = vrot.slane %v155, 2
      %v157 = vadd.f32 %v155, %v156
      %v158 = vrot.slane %v157, 1
      %v159 = vadd.f32 %v157, %v158
      %v160 = vrcp.pop 8.0
      %v161 = vmul.f32 %v159, %v160
      %v162 = vsub.f32 %v153, %v161
      %v163 = vmul.f32 %v162, %v162
      %v164 = vrot.slane %v163, 4
      %v165 = vadd.f32 %v163, %v164
      %v166 = vrot.slane %v165, 2
      %v167 = vadd.f32 %v165, %v166
      %v168 = vrot.slane %v167, 1
      %v169 = vadd.f32 %v167, %v168
      %v170 = vmul.f32 %v169, %v160
      %v171 = vadd.f32 %v170, 1e-05
      %v172 = vrsqrt.pop %v171
      %v173 = vmul.f32 %v162, %v172
      %v174 = vld [vmem:[%s3] sm:$0x1]
      %v176 = vlaneseq
      %v177 = vshrl.u32 %v176, 7
      %v178 = vsub.s32 0, %v177
      %v179 = vrot.slane %v174, %v178
      %v181 = vmul.f32 %v173, %v179
      %v182 = vld [vmem:[%s4] sm:$0x1]
      %v184 = vlaneseq
      %v185 = vshrl.u32 %v184, 7
      %v186 = vsub.s32 0, %v185
      %v187 = vrot.slane %v182, %v186
      %v189 = vadd.f32 %v181, %v187
      %v190 = vmax.f32 %v189, 0.0
      %191 = vst [vmem:[#allocation8] sm:$0xff] %v190
    $region37: #{tpu_custom_call.1} parent=1 // pred_fallthru
      _
    // Predicated region
    $region38: #{tpu_custom_call.1} parent=1 // pred_check
      _
    $region39: #{tpu_custom_call.1} parent=1 // pred_check_branch
      %193 = sbr.rel (0) target = $region41
    $region40: #{tpu_custom_call.1} parent=1 // pred_region
      %s195 = ssub.s32 128, 128
      %196 = vsyncadd [#allocation5], %s195
      %s198 = sshll.u32 [#allocation8], 4
      %s199 = int_to_ptr.vmem [resolvable:$true] %s198
      %201 = dma.vmem_to_hbm [thread:$0]  %s199, 128, %s5, [#allocation5]
    $region41: #{tpu_custom_call.1} parent=1 // pred_fallthru
      _
    // Predicated region
    $region42: #{tpu_custom_call.1} parent=1 // pred_check
      _
    $region43: #{tpu_custom_call.1} parent=1 // pred_check_branch
      %203 = sbr.rel (0) target = $region45
    $region44: #{tpu_custom_call.1} parent=1 // pred_region
      %204 = dma.done [#allocation5], 128
    $region45: #{tpu_custom_call.1} parent=1 // pred_fallthru
      _
    %205 = vsyncpa [#allocation4], 1
    %206 = vsyncpa [#allocation7], 1
    %207 = vsyncpa [#allocation5], 1

</llo_original>
